<compile_context>
chip_gen: v7x
topology: tpu7x:2x2x1
jax: 0.10.0
libtpu: 0.0.40
codegen_flags: <defaults>
</compile_context>

<pallas_src>
import jax
import jax.numpy as jnp
from jax.experimental import pallas as pl
from jax.experimental.pallas import tpu as pltpu


def _aff_kernel(k3_ref, x_ref, y_ref, o_ref):
    # k3_ref: (1,)          SMEM scalar (scalar-prefetch)
    # x_ref : (K, WT, M)    VMEM; M = B*C*H on the lane axis
    # y_ref : (K, M)        VMEM; pre-softmax logits, softmax over K (axis 0)
    # o_ref : (WT, M)       VMEM
    ys = y_ref[...]                                        # (K, M) f32
    m = jnp.max(ys, axis=0, keepdims=True)                 # (1, M)
    e = jnp.exp(ys - m)                                    # EUP
    a = e / jnp.sum(e, axis=0, keepdims=True)              # softmax over blocks
    # weighted sum over K; broadcast attention along the W (sublane) axis
    ctx = jnp.sum(x_ref[...] * a[:, None, :], axis=0)      # (WT, M)
    o_ref[...] = (k3_ref[0] * ctx).astype(o_ref.dtype)


def aff_pallas(x, y, k3):
    """x: (B, C, H, W, K); y: (B, C, H, K, 1); k3: scalar parameter (shape (1,) or ())."""
    B, C, H, W, K = x.shape
    M = B * C * H                                           # lane axis (128 in the demo)

    # ---- wrapper-side layout glue (pure transposes / reshapes) -------------
    # x -> (K, W, M): reduction dim leading, W on sublanes, B*C*H on lanes.
    x_r = jnp.transpose(x.astype(jnp.float32), (4, 3, 0, 1, 2)).reshape(K, W, M)
    # y -> (K, M): one softmax group per lane position.
    y_r = jnp.transpose(y[..., 0].astype(jnp.float32), (3, 0, 1, 2)).reshape(K, M)
    k3_r = jnp.asarray(k3, jnp.float32).reshape(1)

    # Tile W in sublane-aligned chunks; >=2 "parallel" steps when possible
    # so v7x's second TensorCore is used. Falls back to one full-W block.
    if W % 16 == 0:
        WT = max(8, W // 2)
    elif W % 8 == 0:
        WT = 8
    else:
        WT = W
    grid = (W // WT,)

    grid_spec = pltpu.PrefetchScalarGridSpec(
        num_scalar_prefetch=1,                              # k3 -> SMEM
        grid=grid,
        in_specs=[
            pl.BlockSpec((K, WT, M), lambda i, k3s: (0, i, 0)),   # x tile
            pl.BlockSpec((K, M), lambda i, k3s: (0, 0)),          # y (resident)
        ],
        out_specs=pl.BlockSpec((WT, M), lambda i, k3s: (i, 0)),
    )

    out_flat = pl.pallas_call(
        _aff_kernel,
        out_shape=jax.ShapeDtypeStruct((W, M), jnp.float32),
        grid_spec=grid_spec,
        compiler_params=pltpu.CompilerParams(
            dimension_semantics=("parallel",)),
    )(k3_r, x_r, y_r)

    # (W, B*C*H) -> (B, C, H, W) to match the PyTorch view
    return jnp.transpose(out_flat.reshape(W, B, C, H), (1, 2, 3, 0))


def aff_reference(x, y, k3):
    """Pure-JAX reference matching the PyTorch module."""
    a = jax.nn.softmax(y.astype(jnp.float32), axis=-2)      # softmax over blocks (dim=-2)
    ctx = jnp.matmul(x.astype(jnp.float32), a)[..., 0]      # (B, C, H, W)
    return jnp.asarray(k3, jnp.float32).reshape(()) * ctx


if __name__ == "__main__":
    # AFF.forward(x, y) with
    #   x: (batch, channel, height, width, blocks)
    #   y: (batch, channel, height, blocks, 1)   (softmax over dim=-2 = blocks)
    B, C, H, W, K = 2, 4, 16, 16, 8

    key = jax.random.PRNGKey(0)
    kx, ky, kk = jax.random.split(key, 3)
    x = jax.random.normal(kx, (B, C, H, W, K), jnp.float32)
    y = jax.random.normal(ky, (B, C, H, K, 1), jnp.float32)
    # PyTorch initializes k3 = zeros(1) (which would make the output all-zero);
    # use a non-trivial learned value so the correctness check is meaningful.
    k3 = jax.random.normal(kk, (1,), jnp.float32)

    out = jax.block_until_ready(aff_pallas(x, y, k3))
    ref = jax.block_until_ready(aff_reference(x, y, k3))

    assert out.shape == (B, C, H, W)
    assert jnp.allclose(out, ref, atol=1e-4, rtol=1e-4), "mismatch vs reference"
    print("KERNEL_OK")
</pallas_src>

<mosaic_0001>
module attributes {stable_mosaic.version = 11 : i64} {
  func.func @_aff_kernel(%arg0: i32, %arg1: memref<1xf32, #tpu.memory_space<smem>>, %arg2: memref<8x8x128xf32, #tpu.memory_space<vmem>>, %arg3: memref<8x128xf32, #tpu.memory_space<vmem>>, %arg4: memref<8x128xf32, #tpu.memory_space<vmem>>) attributes {dimension_semantics = [#tpu.dimension_semantics<parallel>], iteration_bounds = array<i64: 2>, scalar_prefetch = 1 : i64, scratch_operands = 0 : i64, tpu.core_type = #tpu.core_type<tc>, window_params = [{transform_indices = @transform_0, window_bounds = array<i64: 8, 8, 128>}, {pipeline_mode = #tpu.pipeline_mode<synchronous>, transform_indices = @transform_1, window_bounds = array<i64: 8, 128>}, {transform_indices = @transform_2, window_bounds = array<i64: 8, 128>}]} {
    %c0 = arith.constant 0 : index
    %c0_0 = arith.constant 0 : index
    %0 = vector.load %arg3[%c0, %c0_0] : memref<8x128xf32, #tpu.memory_space<vmem>>, vector<8x128xf32>
    %cst = arith.constant dense<0xFF800000> : vector<128xf32>
    %1 = vector.multi_reduction <maximumf>, %0, %cst [0] : vector<8x128xf32> to vector<128xf32>
    %2 = vector.shape_cast %1 : vector<128xf32> to vector<1x128xf32>
    %3 = vector.broadcast %2 : vector<1x128xf32> to vector<8x128xf32>
    %4 = arith.subf %0, %3 : vector<8x128xf32>
    %5 = math.exp %4 : vector<8x128xf32>
    %cst_1 = arith.constant dense<0.000000e+00> : vector<128xf32>
    %6 = vector.multi_reduction <add>, %5, %cst_1 [0] : vector<8x128xf32> to vector<128xf32>
    %7 = vector.shape_cast %6 : vector<128xf32> to vector<1x128xf32>
    %8 = vector.broadcast %7 : vector<1x128xf32> to vector<8x128xf32>
    %9 = arith.divf %5, %8 : vector<8x128xf32>
    %c0_2 = arith.constant 0 : index
    %c0_3 = arith.constant 0 : index
    %c0_4 = arith.constant 0 : index
    %10 = vector.load %arg2[%c0_2, %c0_3, %c0_4] : memref<8x8x128xf32, #tpu.memory_space<vmem>>, vector<8x8x128xf32>
    %11 = vector.shape_cast %9 : vector<8x128xf32> to vector<8x1x128xf32>
    %12 = vector.broadcast %11 : vector<8x1x128xf32> to vector<8x8x128xf32>
    %13 = arith.mulf %10, %12 : vector<8x8x128xf32>
    %cst_5 = arith.constant dense<0.000000e+00> : vector<8x128xf32>
    %14 = vector.multi_reduction <add>, %13, %cst_5 [0] : vector<8x8x128xf32> to vector<8x128xf32>
    %c0_6 = arith.constant 0 : index
    %15 = memref.load %arg1[%c0_6] : memref<1xf32, #tpu.memory_space<smem>>
    %16 = vector.broadcast %15 : f32 to vector<8x128xf32>
    %17 = arith.mulf %16, %14 : vector<8x128xf32>
    %c0_7 = arith.constant 0 : index
    %c0_8 = arith.constant 0 : index
    %18 = vector.load %arg4[%c0_7, %c0_8] : memref<8x128xf32, #tpu.memory_space<vmem>>, vector<8x128xf32>
    tpu.vector_store %arg4[%c0_7, %c0_8], %17 {strides = array<i32>} : memref<8x128xf32, #tpu.memory_space<vmem>>, vector<8x128xf32>,
    return
  }
  func.func @transform_0(%arg0: i32, %arg1: memref<1xf32, #tpu.memory_space<smem>>) -> (i32, i32, i32) {
    %c0_i32 = arith.constant 0 : i32
    %c0_i32_0 = arith.constant 0 : i32
    %c0_i32_1 = arith.constant 0 : i32
    return %c0_i32, %arg0, %c0_i32_0 : i32, i32, i32
  }
  func.func @transform_1(%arg0: i32, %arg1: memref<1xf32, #tpu.memory_space<smem>>) -> (i32, i32) {
    %c0_i32 = arith.constant 0 : i32
    %c0_i32_0 = arith.constant 0 : i32
    %c0_i32_1 = arith.constant 0 : i32
    return %c0_i32, %c0_i32_0 : i32, i32
  }
  func.func @transform_2(%arg0: i32, %arg1: memref<1xf32, #tpu.memory_space<smem>>) -> (i32, i32) {
    %c0_i32 = arith.constant 0 : i32
    %c0_i32_0 = arith.constant 0 : i32
    return %arg0, %c0_i32 : i32, i32
  }
}

</mosaic_0001>

<llo_original>
// kernel: tpu_custom_call.1
$region0: #{tpu_custom_call.1}
  #allocation0 [shape = 'u32[]', space=smem, size = 0x4, offset = 0x4, fixed_abs, tag = 'smem constant byte address 0x4 - core index']
  #allocation1 [shape = 'u32[144,128]{1,0:T(1,128)}', space=vmem, size = 0x12000, scoped, tag = 'internal scratch']
  #allocation2 [shape = 's32[1]{0}', space=sflag, size = 0x4, scoped, tag = 'scoped memory for tpu_custom_call.1']
  #allocation3 [shape = 'f32[1]{0:T(128)S(6)}', space=smem, size = 0x200, scoped, tag = 'prefetched SMEM operand 0']
  %s0 = inlined_call_operand.<no memory space> [shape: f32[1], index: 0, kind: input, shape index: {}]
  %s1 = inlined_call_operand.hbm [shape: f32[8,16,128], index: 1, kind: input, shape index: {}]
  %s2 = inlined_call_operand.hbm [shape: f32[8,128], index: 2, kind: input, shape index: {}]
  %s3 = inlined_call_operand.hbm [shape: f32[16,128], index: 3, kind: output, shape index: {}]
  %s4 = sld [smem:[#allocation0]]
  $region49: #{tpu_custom_call.1} parent=0
    _
  %s6 = ssub.s32 1, %s4
  %s7 = scalar_select 0, %s6, %s4
  %8 = sst [smem:[#allocation3]] %s0
  $region1: #{tpu_custom_call.1} parent=0
    #allocation4 [shape = 'u8[65536]{0}', space=vmem, size = 0x10000, scoped, tag = 'input window, operand 1']
    #allocation5 [shape = 's32[2]{0}', space=sflag, size = 0x8, scoped, tag = 'scoped memory for tpu_custom_call.1']
    #allocation6 [shape = 's32[2]{0}', space=sflag, size = 0x8, scoped, tag = 'scoped memory for tpu_custom_call.1']
    #allocation7 [shape = 'u8[4096]{0}', space=vmem, size = 0x1000, scoped, tag = 'input window, operand 2, single buffered']
    #allocation8 [shape = 's32[1]{0}', space=sflag, size = 0x4, scoped, tag = 'scoped memory for tpu_custom_call.1']
    #allocation9 [shape = 'u8[8192]{0}', space=vmem, size = 0x2000, scoped, tag = 'output window, operand 0']
    %9 = vsyncpa [#allocation5], 0
    %s10 = scalar_lea.sflag [#allocation5], 1
    %11 = vsyncpa %s10, 0
    %12 = vsyncpa [#allocation8], 0
    %13 = vsyncpa [#allocation6], 0
    %s14 = scalar_lea.sflag [#allocation6], 1
    %15 = vsyncpa %s14, 0
    loop: start=0, step=1, limit=4
    $region2: #{tpu_custom_call.1} parent=1 // loop_pre_header
      _
    $region3: #{tpu_custom_call.1} parent=1 // loop_header
      %s17 = sphi 0, %s21
      %p18 = scmp.ge.s32.totalorder %s17, 4
      %s27 = sphi 0, %s29
      %s30 = sphi 0, %s27
      %s31 = sphi 0, %s30
      %s47 = sphi 0, %s31
      %s51 = sphi 0, %s51
      %s53 = sphi 0, %s51
      %s54 = sphi 0, %s53
      %s68 = sphi 0, %s54
      %s74 = sphi 0, %s76
      %s77 = sphi 0, %s74
      %s78 = sphi 0, %s77
      %s94 = sphi 0, %s78
    $region4: #{tpu_custom_call.1} parent=1 // loop_header_branch
      %20 = sbr.rel (%p18) target = $region8
    $region5: #{tpu_custom_call.1} parent=1 // loop_body
      %s22 = ssub.s32 %s17, 1
      %s23 = ssub.s32 %s17, 2
      %s24 = sadd.s32 %s17, 1
      %s25 = ssub.s32 %s17, %s24
      %p26 = scmp.eq.s32.totalorder %s25, 0
      %s28 = sadd.s32 %s27, 1
      %s29 = scalar_select %p26, %s27, %s28
      %p32 = pneg %p26
      %p33 = scmp.eq.s32.totalorder %s17, 1
      %p34 = por %p32, %p33
      %p35 = scmp.ne.s32.totalorder %s27, %s30
      %p36 = scmp.eq.s32.totalorder %s17, 0
      %p37 = por %p35, %p36
      %p38 = scmp.ne.s32.totalorder %s27, %s30
      %p39 = scmp.eq.s32.totalorder %s22, 1
      %p40 = por %p38, %p39
      %p41 = scmp.ne.s32.totalorder %s30, %s31
      %p42 = scmp.eq.s32.totalorder %s22, 0
      %p43 = por %p41, %p42
      %p44 = scmp.ne.s32.totalorder %s30, %s31
      %p45 = scmp.eq.s32.totalorder %s23, 1
      %p46 = por %p44, %p45
      %p48 = scmp.ne.s32.totalorder %s31, %s47
      %p49 = scmp.eq.s32.totalorder %s23, 0
      %p50 = por %p48, %p49
      %s52 = sadd.s32 %s51, 1
      %p55 = scmp.eq.s32.totalorder %s17, 1
      %p56 = scmp.ne.s32.totalorder %s51, %s53
      %p57 = scmp.eq.s32.totalorder %s17, 0
      %p58 = por %p56, %p57
      %p59 = scmp.ne.s32.totalorder %s51, %s53
      %p60 = scmp.eq.s32.totalorder %s22, 1
      %p61 = por %p59, %p60
      %p62 = scmp.ne.s32.totalorder %s53, %s54
      %p63 = scmp.eq.s32.totalorder %s22, 0
      %p64 = por %p62, %p63
      %p65 = scmp.ne.s32.totalorder %s53, %s54
      %p66 = scmp.eq.s32.totalorder %s23, 1
      %p67 = por %p65, %p66
      %p69 = scmp.ne.s32.totalorder %s54, %s68
      %p70 = scmp.eq.s32.totalorder %s23, 0
      %p71 = por %p69, %p70
      %s72 = ssub.s32 %s17, %s24
      %p73 = scmp.eq.s32.totalorder %s72, 0
      %s75 = sadd.s32 %s74, 1
      %s76 = scalar_select %p73, %s74, %s75
      %p79 = pneg %p73
      %p80 = scmp.eq.s32.totalorder %s17, 1
      %p81 = por %p79, %p80
      %p82 = scmp.ne.s32.totalorder %s74, %s77
      %p83 = scmp.eq.s32.totalorder %s17, 0
      %p84 = por %p82, %p83
      %p85 = scmp.ne.s32.totalorder %s74, %s77
      %p86 = scmp.eq.s32.totalorder %s22, 1
      %p87 = por %p85, %p86
      %p88 = scmp.ne.s32.totalorder %s77, %s78
      %p89 = scmp.eq.s32.totalorder %s22, 0
      %p90 = por %p88, %p89
      %p91 = scmp.ne.s32.totalorder %s77, %s78
      %p92 = scmp.eq.s32.totalorder %s23, 1
      %p93 = por %p91, %p92
      %p95 = scmp.ne.s32.totalorder %s78, %s94
      %p96 = scmp.eq.s32.totalorder %s23, 0
      %p97 = por %p95, %p96
      %p98 = scmp.le.s32.totalorder 1, %s17
      %p99 = scmp.lt.s32.totalorder %s17, 3
      %p100 = pnand %p98, %p99
      %p101 = pneg %p100
      // Predicated region
      $region9: #{tpu_custom_call.1} parent=5 // pred_check
        _
      $region10: #{tpu_custom_call.1} parent=5 // pred_check_branch
        %103 = sbr.rel (%p100) target = $region12
      $region11: #{tpu_custom_call.1} parent=5 // pred_region
        %s104 = ssub.s32 %s17, 1
        // Predicated region
        $region13: #{tpu_custom_call.1} parent=11 // pred_check
          %p105 = pneg %p64
        $region14: #{tpu_custom_call.1} parent=11 // pred_check_branch
          %107 = sbr.rel (%p105) target = $region16
        $region15: #{tpu_custom_call.1} parent=11 // pred_region
          %s109 = ssub.s32 128, 128
          %110 = vsyncadd [#allocation8], %s109
          %s112 = sshll.u32 [#allocation7], 4
          %s113 = int_to_ptr.vmem [resolvable:$true] %s112
          %115 = dma.hbm_to_vmem [thread:$0]  %s2, 128, %s113, [#allocation8]
        $region16: #{tpu_custom_call.1} parent=11 // pred_fallthru
          _
      $region12: #{tpu_custom_call.1} parent=5 // pred_fallthru
        _
      %p116 = scmp.lt.s32.totalorder %s17, 2
      // Predicated region
      $region17: #{tpu_custom_call.1} parent=5 // pred_check
        %p117 = pneg %p116
      $region18: #{tpu_custom_call.1} parent=5 // pred_check_branch
        %119 = sbr.rel (%p117) target = $region20
      $region19: #{tpu_custom_call.1} parent=5 // pred_region
        // Predicated region
        $region21: #{tpu_custom_call.1} parent=19 // pred_check
          %p120 = pneg %p37
        $region22: #{tpu_custom_call.1} parent=19 // pred_check_branch
          %122 = sbr.rel (%p120) target = $region24
        $region23: #{tpu_custom_call.1} parent=19 // pred_region
          %s123 = sand.u32 %s27, 1
          %s124 = scalar_lea.sflag [#allocation5], %s123
          %s125 = sand.u32 %s27, 1
          %s126 = smul.addr %s125, 64
          %s127 = scalar_lea.vmem [#allocation4], %s126
          %s129 = ssub.s32 1024, 1024
          %130 = vsyncadd %s124, %s129
          %s131 = smul.addr %s17, 128
          %s132 = scalar_lea.hbm %s1, %s131
          %s133 = sshll.u32 %s127, 4
          %s134 = int_to_ptr.vmem [resolvable:$true] %s133
          %139 = dma.hbm_to_vmem [thread:$0]  %s132, 1024, %s134, %s124, 256, 128, 8
        $region24: #{tpu_custom_call.1} parent=19 // pred_fallthru
          _
      $region20: #{tpu_custom_call.1} parent=5 // pred_fallthru
        _
      %p140 = scmp.le.s32.totalorder 1, %s17
      %p141 = scmp.lt.s32.totalorder %s17, 3
      %p142 = pnand %p140, %p141
      %p143 = pneg %p142
      // Predicated region
      $region25: #{tpu_custom_call.1} parent=5 // pred_check
        _
      $region26: #{tpu_custom_call.1} parent=5 // pred_check_branch
        %145 = sbr.rel (%p142) target = $region28
      $region27: #{tpu_custom_call.1} parent=5 // pred_region
        %s146 = ssub.s32 %s17, 1
        %s147 = sand.u32 %s30, 1
        %s148 = scalar_lea.sflag [#allocation5], %s147
        %s149 = sand.u32 %s30, 1
        %s150 = smul.addr %s149, 64
        %s151 = scalar_lea.vmem [#allocation4], %s150
        // Predicated region
        $region29: #{tpu_custom_call.1} parent=27 // pred_check
          %p152 = pneg %p43
        $region30: #{tpu_custom_call.1} parent=27 // pred_check_branch
          %154 = sbr.rel (%p152) target = $region32
        $region31: #{tpu_custom_call.1} parent=27 // pred_region
          %155 = dma.done %s148, 1024
        $region32: #{tpu_custom_call.1} parent=27 // pred_fallthru
          _
        // Predicated region
        $region33: #{tpu_custom_call.1} parent=27 // pred_check
          %p156 = pneg %p64
        $region34: #{tpu_custom_call.1} parent=27 // pred_check_branch
          %158 = sbr.rel (%p156) target = $region36
        $region35: #{tpu_custom_call.1} parent=27 // pred_region
          %159 = dma.done [#allocation8], 128
        $region36: #{tpu_custom_call.1} parent=27 // pred_fallthru
          _
        %s160 = sand.u32 %s30, 1
        %s161 = scalar_lea.sflag [#allocation5], %s160
        %s162 = sand.u32 %s30, 1
        %s163 = smul.addr %s162, 64
        %s164 = scalar_lea.vmem [#allocation4], %s163
        %p165 = pneg %p43
        %p166 = pneg %p40
        %p167 = pneg %p64
        %p168 = pneg %p61
        %p169 = pneg %p90
        %p170 = pneg %p87
        %s171 = sand.u32 %s77, 1
        %s172 = scalar_lea.sflag [#allocation6], %s171
        %s173 = sand.u32 %s77, 1
        %s174 = smul.addr %s173, 8
        %s175 = scalar_lea.vmem [#allocation9], %s174
        %v176 = vld [vmem:[#allocation7] sm:$0xff]
        %v177 = vrot.slane %v176, 4
        %v178 = vmax.f32 %v176, %v177
        %v179 = vrot.slane %v178, 2
        %v180 = vmax.f32 %v178, %v179
        %v181 = vrot.slane %v180, 1
        %v182 = vmax.f32 %v180, %v181
        %v183 = vsub.f32 %v176, %v182
        %v184 = vmul.f32 %v183, 1.442695
        %v185 = vpow.pop %v184
        %v186 = vrot.slane %v185, 4
        %v187 = vadd.f32 %v185, %v186
        %v188 = vrot.slane %v187, 2
        %v189 = vadd.f32 %v187, %v188
        %v190 = vrot.slane %v189, 1
        %v191 = vadd.f32 %v189, %v190
        %v192 = vrcp.pop %v191
        %v193 = vmul.f32 %v185, %v192
        %v194 = vld [vmem:[%s151] sm:$0xff]
        %v195 = vld [vmem:[%s151 + $0x8] sm:$0xff]
        %v196 = vld [vmem:[%s151 + $0x10] sm:$0xff]
        %v197 = vld [vmem:[%s151 + $0x18] sm:$0xff]
        %v198 = vld [vmem:[%s151 + $0x20] sm:$0xff]
        %v199 = vld [vmem:[%s151 + $0x28] sm:$0xff]
        %v200 = vld [vmem:[%s151 + $0x30] sm:$0xff]
        %v201 = vld [vmem:[%s151 + $0x38] sm:$0xff]
        %v203 = vcombine.high %v193, %v193
        %v205 = vunpack.c.l.s4 1966171168
        %v206 = vunpack.c.0.s8 %v205
        %v207 = vlaneseq
        %v208 = vshrl.u32 %v207, 7
        %v209 = vsub.s32 %v206, %v208
        %v210 = vrot.slane %v193, %v209
        %v212 = vunpack.c.l.s4 1966171168
        %v213 = vunpack.c.0.s8 %v212
        %v214 = vlaneseq
        %v215 = vshrl.u32 %v214, 7
        %v216 = vsub.s32 %v213, %v215
        %v217 = vrot.slane %v203, %v216
        %v218 = vcombine.high %v210, %v210
        %v219 = vcombine.high %v217, %v217
        %v221 = vunpack.c.l.s4 1966171168
        %v222 = vunpack.c.0.s8 %v221
        %v223 = vlaneseq
        %v224 = vshrl.u32 %v223, 7
        %v225 = vsub.s32 %v222, %v224
        %v226 = vrot.slane %v210, %v225
        %v228 = vunpack.c.l.s4 1966171168
        %v229 = vunpack.c.0.s8 %v228
        %v230 = vlaneseq
        %v231 = vshrl.u32 %v230, 7
        %v232 = vsub.s32 %v229, %v231
        %v233 = vrot.slane %v217, %v232
        %v235 = vunpack.c.l.s4 1966171168
        %v236 = vunpack.c.0.s8 %v235
        %v237 = vlaneseq
        %v238 = vshrl.u32 %v237, 7
        %v239 = vsub.s32 %v236, %v238
        %v240 = vrot.slane %v218, %v239
        %v242 = vunpack.c.l.s4 1966171168
        %v243 = vunpack.c.0.s8 %v242
        %v244 = vlaneseq
        %v245 = vshrl.u32 %v244, 7
        %v246 = vsub.s32 %v243, %v245
        %v247 = vrot.slane %v219, %v246
        %v248 = vcombine.high %v226, %v226
        %v249 = vcombine.high %v233, %v233
        %v250 = vcombine.high %v240, %v240
        %v251 = vcombine.high %v247, %v247
        %v252 = vlaneseq
        %v253 = vshrl.u32 %v252, 7
        %v254 = vsub.s32 0, %v253
        %v255 = vrot.slane %v226, %v254
        %v256 = vlaneseq
        %v257 = vshrl.u32 %v256, 7
        %v258 = vsub.s32 0, %v257
        %v259 = vrot.slane %v240, %v258
        %v260 = vlaneseq
        %v261 = vshrl.u32 %v260, 7
        %v262 = vsub.s32 0, %v261
        %v263 = vrot.slane %v248, %v262
        %v264 = vlaneseq
        %v265 = vshrl.u32 %v264, 7
        %v266 = vsub.s32 0, %v265
        %v267 = vrot.slane %v250, %v266
        %v268 = vlaneseq
        %v269 = vshrl.u32 %v268, 7
        %v270 = vsub.s32 0, %v269
        %v271 = vrot.slane %v233, %v270
        %v272 = vlaneseq
        %v273 = vshrl.u32 %v272, 7
        %v274 = vsub.s32 0, %v273
        %v275 = vrot.slane %v247, %v274
        %v276 = vlaneseq
        %v277 = vshrl.u32 %v276, 7
        %v278 = vsub.s32 0, %v277
        %v279 = vrot.slane %v249, %v278
        %v280 = vlaneseq
        %v281 = vshrl.u32 %v280, 7
        %v282 = vsub.s32 0, %v281
        %v283 = vrot.slane %v251, %v282
        %v292 = vmul.f32 %v194, %v255
        %v293 = vmul.f32 %v195, %v259
        %v294 = vmul.f32 %v196, %v263
        %v295 = vmul.f32 %v197, %v267
        %v296 = vmul.f32 %v198, %v271
        %v297 = vmul.f32 %v199, %v275
        %v298 = vmul.f32 %v200, %v279
        %v299 = vmul.f32 %v201, %v283
        %v300 = vadd.f32 %v292, %v293
        %v301 = vadd.f32 %v300, %v294
        %v302 = vadd.f32 %v301, %v295
        %v303 = vadd.f32 %v302, %v296
        %v304 = vadd.f32 %v303, %v297
        %v305 = vadd.f32 %v304, %v298
        %v306 = vadd.f32 %v305, %v299
        %s307 = sld [smem:[#allocation3]]
        %v308 = vstv %s307
        %v309 = vmul.f32 %v308, %v306
        %310 = vst [vmem:[%s175] sm:$0xff] %v309
        %s311 = sand.u32 %s77, 1
        %s312 = scalar_lea.sflag [#allocation6], %s311
        %s313 = sand.u32 %s77, 1
        %s314 = smul.addr %s313, 8
        %s315 = scalar_lea.vmem [#allocation9], %s314
        // Predicated region
        $region37: #{tpu_custom_call.1} parent=27 // pred_check
          %p316 = pneg %p87
        $region38: #{tpu_custom_call.1} parent=27 // pred_check_branch
          %318 = sbr.rel (%p316) target = $region40
        $region39: #{tpu_custom_call.1} parent=27 // pred_region
          %s320 = ssub.s32 128, 128
          %321 = vsyncadd %s312, %s320
          %s322 = smul.addr %s22, 128
          %s323 = scalar_lea.hbm %s3, %s322
          %s325 = sshll.u32 %s315, 4
          %s326 = int_to_ptr.vmem [resolvable:$true] %s325
          %328 = dma.vmem_to_hbm [thread:$0]  %s326, 128, %s323, %s312
        $region40: #{tpu_custom_call.1} parent=27 // pred_fallthru
          _
      $region28: #{tpu_custom_call.1} parent=5 // pred_fallthru
        _
      %p329 = scmp.le.s32.totalorder 2, %s17
      // Predicated region
      $region41: #{tpu_custom_call.1} parent=5 // pred_check
        %p330 = pneg %p329
      $region42: #{tpu_custom_call.1} parent=5 // pred_check_branch
        %332 = sbr.rel (%p330) target = $region44
      $region43: #{tpu_custom_call.1} parent=5 // pred_region
        %s333 = ssub.s32 %s17, 2
        // Predicated region
        $region45: #{tpu_custom_call.1} parent=43 // pred_check
          %p334 = pneg %p93
        $region46: #{tpu_custom_call.1} parent=43 // pred_check_branch
          %336 = sbr.rel (%p334) target = $region48
        $region47: #{tpu_custom_call.1} parent=43 // pred_region
          %s337 = sand.u32 %s78, 1
          %s338 = scalar_lea.sflag [#allocation6], %s337
          %s339 = sand.u32 %s78, 1
          %s340 = smul.addr %s339, 8
          %s341 = scalar_lea.vmem [#allocation9], %s340
          %342 = dma.done %s338, 128
        $region48: #{tpu_custom_call.1} parent=43 // pred_fallthru
          _
      $region44: #{tpu_custom_call.1} parent=5 // pred_fallthru
        _
    $region6: #{tpu_custom_call.1} parent=1 // loop_footer
      %s21 = sadd.s32 1, %s17
    $region7: #{tpu_custom_call.1} parent=1 // loop_footer_branch
      %16 = sbr.rel target = $region3
    $region8: #{tpu_custom_call.1} parent=1 // loop_exit
      _
    %343 = vsyncpa [#allocation5], 1
    %s344 = scalar_lea.sflag [#allocation5], 1
    %345 = vsyncpa %s344, 1
    %346 = vsyncpa [#allocation8], 1
    %347 = vsyncpa [#allocation6], 1
    %s348 = scalar_lea.sflag [#allocation6], 1
    %349 = vsyncpa %s348, 1

</llo_original>
